<compile_context>
chip_gen: v7x
topology: tpu7x:2x2x1
jax: 0.10.0
libtpu: 0.0.40
codegen_flags: <defaults>
</compile_context>

<pallas_src>
import functools

import jax
import jax.numpy as jnp
from jax.experimental import pallas as pl
from jax.experimental.pallas import tpu as pltpu


def _round_up(x, m):
    return ((x + m - 1) // m) * m


def _fused_encode_l1norm_kernel(xa_ref, xf_ref, xg_ref, xo_ref,
                                w1_ref, b1_ref, w2_ref, b2_ref, s_ref,
                                o_ref, *, dim_per_view, num_views):
    """Four ContrastiveEncode MLPs + per-view L1 normalization on one batch tile.

    Inputs are the 4 per-view activation tiles [TB, D]; the output is the packed
    lane-dense [TB, V*D] tile.  No cross-batch reduction anywhere (safe with
    padded last tiles when B % TB != 0).
    """
    d = dim_per_view

    # ---- Layer 1: block-diagonal matmul as 4 per-view row-slab matmuls -------
    # X_cat @ W1_bd == sum_g  x_g @ W1_bd[g*D:(g+1)*D, :]   (static ref slices),
    # so the packed [TB, V*D] hidden appears directly -- no lane concat needed.
    x_refs = (xa_ref, xf_ref, xg_ref, xo_ref)
    h = None
    for g in range(num_views):
        part = jnp.dot(x_refs[g][...].astype(jnp.bfloat16),
                       w1_ref[g * d:(g + 1) * d, :],
                       preferred_element_type=jnp.float32)
        h = part if h is None else h + part
    h = jnp.maximum(h + b1_ref[...], 0.0)                       # bias + ReLU (f32)

    # ---- Layer 2: single fused block-diagonal matmul --------------------------
    y = jnp.dot(h.astype(jnp.bfloat16), w2_ref[...],
                preferred_element_type=jnp.float32) + b2_ref[...]

    # ---- Segmented L1 normalize (per view), denominator on the MXU ------------
    # S is block-ones on the 4 DxD diagonal blocks, so every lane of view g gets
    # that view's sum(|y|).  Exact division == F.normalize(p=1, dim=1, eps=1e-12).
    denom = jnp.dot(jnp.abs(y), s_ref[...], preferred_element_type=jnp.float32)
    o_ref[...] = y / jnp.maximum(denom, 1e-12)


def fused_contrastive_encode_l1norm(atom_feat, fg_feat, graph_feat, f_out,
                                    fused_params, *, dim_per_view, num_views=4):
    """Run the fused 4-view ContrastiveEncode + segmented-L1-normalize kernel.

    Per-view activations: [B, D] float32 each (view order: atom, fg, graph, f_out).
    fused_params: (w1_bd[F,F] bf16, b1[1,F] f32, w2_bd[F,F] bf16, b2[1,F] f32,
                   s_full[F,F] f32)   with F = num_views * D, weights as [in, out].
    Returns the packed normalized features [B, F] float32.
    """
    w1_bd, b1_cat, w2_bd, b2_cat, s_full = fused_params
    B, D = atom_feat.shape
    assert D == dim_per_view
    F = D * num_views
    assert w1_bd.shape == (F, F) and w2_bd.shape == (F, F) and s_full.shape == (F, F)

    # Batch tile: one block for tiny B; otherwise a multiple-of-8 tile chosen so
    # the grid has >= 4 steps (feeds both v7x TensorCores with pipeline overlap),
    # capped at 1024 rows (~1 MiB/step of activation traffic -> HBM-roofline regime).
    if B <= 32:
        TB = B
    else:
        TB = min(1024, max(8, _round_up(pl.cdiv(B, 4), 8)))
    grid = (pl.cdiv(B, TB),)

    cost = pl.CostEstimate(
        flops=3 * 2 * B * F * F,                      # 2 MLP layers + denom matmul
        transcendentals=B * F,                        # exact divide per output elem
        bytes_accessed=(4 * B * D * 4) + (B * F * 4)  # activations in + packed out
        + (2 * F * F * 2) + (F * F * 4) + (2 * F * 4),  # resident weights / S / biases
    )

    kernel = functools.partial(_fused_encode_l1norm_kernel,
                               dim_per_view=D, num_views=num_views)

    return pl.pallas_call(
        kernel,
        out_shape=jax.ShapeDtypeStruct((B, F), jnp.float32),
        grid=grid,
        in_specs=[
            pl.BlockSpec((TB, D), lambda i: (i, 0)),   # atom  (batch-tiled)
            pl.BlockSpec((TB, D), lambda i: (i, 0)),   # fg
            pl.BlockSpec((TB, D), lambda i: (i, 0)),   # graph
            pl.BlockSpec((TB, D), lambda i: (i, 0)),   # f_out
            pl.BlockSpec((F, F), lambda i: (0, 0)),    # W1 block-diag (bf16, resident)
            pl.BlockSpec((1, F), lambda i: (0, 0)),    # b1 (resident)
            pl.BlockSpec((F, F), lambda i: (0, 0)),    # W2 block-diag (bf16, resident)
            pl.BlockSpec((1, F), lambda i: (0, 0)),    # b2 (resident)
            pl.BlockSpec((F, F), lambda i: (0, 0)),    # S block-ones (f32, resident)
        ],
        out_specs=pl.BlockSpec((TB, F), lambda i: (i, 0)),  # packed, lane-dense
        compiler_params=pltpu.CompilerParams(
            dimension_semantics=("parallel",)),
        cost_estimate=cost,
    )(atom_feat, fg_feat, graph_feat, f_out, w1_bd, b1_cat, w2_bd, b2_cat, s_full)


def init_contrastive_encode_params(key, dim_feat):
    """Deterministic init mimicking torch.nn.Linear default U(-1/sqrt(in), 1/sqrt(in)).

    Weights are stored/used as [in, out] with x @ W.  NOTE: a real torch checkpoint
    stores Linear weights as [out, in]; transpose before pack_view_params.
    """
    k1, k2, k3, k4 = jax.random.split(key, 4)
    bound = 1.0 / jnp.sqrt(jnp.float32(dim_feat))
    w1 = jax.random.uniform(k1, (dim_feat, dim_feat), jnp.float32, -bound, bound)
    b1 = jax.random.uniform(k2, (1, dim_feat), jnp.float32, -bound, bound)
    w2 = jax.random.uniform(k3, (dim_feat, dim_feat), jnp.float32, -bound, bound)
    b2 = jax.random.uniform(k4, (1, dim_feat), jnp.float32, -bound, bound)
    return w1, b1, w2, b2


def pack_view_params(params_per_view):
    """Pack per-view (w1, b1, w2, b2) into fused block-diagonal weights, concat
    biases and the block-ones L1-segment matrix.  Done ONCE at parameter-load time."""
    num_views = len(params_per_view)
    d = params_per_view[0][0].shape[0]
    w1_bd = jax.scipy.linalg.block_diag(*[p[0] for p in params_per_view])
    w2_bd = jax.scipy.linalg.block_diag(*[p[2] for p in params_per_view])
    b1_cat = jnp.concatenate([p[1] for p in params_per_view], axis=1)
    b2_cat = jnp.concatenate([p[3] for p in params_per_view], axis=1)
    s_full = jax.scipy.linalg.block_diag(
        *([jnp.ones((d, d), jnp.float32)] * num_views))
    return (w1_bd.astype(jnp.bfloat16), b1_cat,
            w2_bd.astype(jnp.bfloat16), b2_cat, s_full)


def mol_property_prediction_forward(f_out, atom_feat, fg_feat, graph_feat,
                                    fused_params, emb_dim):
    """JAX/Pallas equivalent of MolPropertyPrediction.forward (eval, minus MoE heads).

    Returns the PACKED normalized features [B, 4*emb_dim] in view order
    (atom, fg, graph, f_out).  Downstream consumers should consume this packed
    layout directly; re-slicing into four tensors costs an extra HBM roundtrip
    (use split_views only where per-view tensors are truly required).
    """
    # TODO(synk): MLPMoE classifier heads (output_final/atom/fg/gnn, loss_auc) are
    # undefined in the reference and therefore not implemented.
    return fused_contrastive_encode_l1norm(
        atom_feat, fg_feat, graph_feat, f_out, fused_params,
        dim_per_view=emb_dim, num_views=4)


def split_views(packed, emb_dim):
    """Optional compatibility helper -> (atom, fg, graph, f_out) views."""
    return tuple(packed[:, g * emb_dim:(g + 1) * emb_dim] for g in range(4))


def _reference_view(x, w1, b1, w2, b2):
    """Pure-JAX f32 reference for one ContrastiveEncode + L1 normalize."""
    h = jnp.maximum(x @ w1 + b1, 0.0)
    y = h @ w2 + b2
    denom = jnp.maximum(jnp.sum(jnp.abs(y), axis=1, keepdims=True), 1e-12)
    return y / denom


def _check(outs_packed, feats, params_per_view, emb_dim, batch):
    outs = split_views(outs_packed, emb_dim)
    # Sanity 1: L1 norm along dim=1 of each view should be ~1 (exact division).
    for o in outs:
        assert o.shape == (batch, emb_dim)
        l1 = jnp.sum(jnp.abs(o), axis=1)
        assert bool(jnp.all(jnp.abs(l1 - 1.0) < 1e-3)), "L1 norm check failed"
    # Sanity 2: match the f32 pure-JAX reference (bf16 MXU inputs -> loose atol).
    for o, x, p in zip(outs, feats, params_per_view):
        r = _reference_view(x, *p)
        assert bool(jnp.allclose(o, r, atol=3e-2, rtol=0.0)), "value check failed"


if __name__ == "__main__":
    # Small shapes consistent with the module: emb_dim = num_dim * power.
    num_dim = 8
    power = 4
    emb_dim = num_dim * power  # 32  -> fused lane width = 4 * 32 = 128

    key = jax.random.PRNGKey(0)
    k_feat, k_p0, k_p1, k_p2, k_p3 = jax.random.split(key, 5)

    # Per-view params in the forward's view order, then packed once.
    params_atom = init_contrastive_encode_params(k_p1, emb_dim)   # enc_joint_1
    params_fg = init_contrastive_encode_params(k_p2, emb_dim)     # enc_joint_2
    params_graph = init_contrastive_encode_params(k_p3, emb_dim)  # enc_joint_3
    params_fout = init_contrastive_encode_params(k_p0, emb_dim)   # enc_joint
    params_per_view = [params_atom, params_fg, params_graph, params_fout]
    fused_params = pack_view_params(params_per_view)

    # --- case 1: tiny batch (single block, block == full array dims) ----------
    batch = 2
    kf0, kf1, kf2, kf3 = jax.random.split(k_feat, 4)
    f_out = jax.random.normal(kf0, (batch, emb_dim), jnp.float32)
    atom_feat = jax.random.normal(kf1, (batch, emb_dim), jnp.float32)
    fg_feat = jax.random.normal(kf2, (batch, emb_dim), jnp.float32)
    graph_feat = jax.random.normal(kf3, (batch, emb_dim), jnp.float32)

    packed = mol_property_prediction_forward(
        f_out, atom_feat, fg_feat, graph_feat, fused_params, emb_dim)
    packed = jax.block_until_ready(packed)
    _check(packed, (atom_feat, fg_feat, graph_feat, f_out),
           params_per_view, emb_dim, batch)

    # --- case 2: moderate batch, non-divisible by the tile (grid of 4, padded
    # last block exercises the masked writeback path) ---------------------------
    batch2 = 50
    kg0, kg1, kg2, kg3 = jax.random.split(jax.random.PRNGKey(1), 4)
    f_out2 = jax.random.normal(kg0, (batch2, emb_dim), jnp.float32)
    atom2 = jax.random.normal(kg1, (batch2, emb_dim), jnp.float32)
    fg2 = jax.random.normal(kg2, (batch2, emb_dim), jnp.float32)
    graph2 = jax.random.normal(kg3, (batch2, emb_dim), jnp.float32)

    packed2 = mol_property_prediction_forward(
        f_out2, atom2, fg2, graph2, fused_params, emb_dim)
    packed2 = jax.block_until_ready(packed2)
    _check(packed2, (atom2, fg2, graph2, f_out2),
           params_per_view, emb_dim, batch2)

    print("KERNEL_OK")
</pallas_src>

<mosaic_0001>
module attributes {stable_mosaic.version = 11 : i64} {
  func.func @_fused_encode_l1norm_kernel(%arg0: i32, %arg1: memref<2x32xf32, #tpu.memory_space<vmem>>, %arg2: memref<2x32xf32, #tpu.memory_space<vmem>>, %arg3: memref<2x32xf32, #tpu.memory_space<vmem>>, %arg4: memref<2x32xf32, #tpu.memory_space<vmem>>, %arg5: memref<128x128xbf16, #tpu.memory_space<vmem>>, %arg6: memref<1x128xf32, #tpu.memory_space<vmem>>, %arg7: memref<128x128xbf16, #tpu.memory_space<vmem>>, %arg8: memref<1x128xf32, #tpu.memory_space<vmem>>, %arg9: memref<128x128xf32, #tpu.memory_space<vmem>>, %arg10: memref<2x128xf32, #tpu.memory_space<vmem>>) attributes {dimension_semantics = [#tpu.dimension_semantics<parallel>], iteration_bounds = array<i64: 1>, scalar_prefetch = 0 : i64, scratch_operands = 0 : i64, tpu.core_type = #tpu.core_type<tc>, window_params = [{transform_indices = @transform_0, window_bounds = array<i64: 2, 32>}, {transform_indices = @transform_1, window_bounds = array<i64: 2, 32>}, {transform_indices = @transform_2, window_bounds = array<i64: 2, 32>}, {transform_indices = @transform_3, window_bounds = array<i64: 2, 32>}, {pipeline_mode = #tpu.pipeline_mode<synchronous>, transform_indices = @transform_4, window_bounds = array<i64: 128, 128>}, {pipeline_mode = #tpu.pipeline_mode<synchronous>, transform_indices = @transform_5, window_bounds = array<i64: 1, 128>}, {pipeline_mode = #tpu.pipeline_mode<synchronous>, transform_indices = @transform_6, window_bounds = array<i64: 128, 128>}, {pipeline_mode = #tpu.pipeline_mode<synchronous>, transform_indices = @transform_7, window_bounds = array<i64: 1, 128>}, {pipeline_mode = #tpu.pipeline_mode<synchronous>, transform_indices = @transform_8, window_bounds = array<i64: 128, 128>}, {transform_indices = @transform_9, window_bounds = array<i64: 2, 128>}]} {
    %c0 = arith.constant 0 : index
    %c0_0 = arith.constant 0 : index
    %0 = vector.load %arg1[%c0, %c0_0] : memref<2x32xf32, #tpu.memory_space<vmem>>, vector<2x32xf32>
    %1 = arith.truncf %0 : vector<2x32xf32> to vector<2x32xbf16>
    %c0_1 = arith.constant 0 : index
    %c0_2 = arith.constant 0 : index
    %2 = vector.load %arg5[%c0_1, %c0_2] : memref<128x128xbf16, #tpu.memory_space<vmem>>, vector<32x128xbf16>
    %cst = arith.constant dense<0.000000e+00> : vector<2x128xf32>
    %3 = tpu.matmul %1, %2, %cst {dimension_numbers = #tpu.dot_dimension_numbers<[1], [0], [0], [1], [0, 0, 1, 1], [], []>} : vector<2x32xbf16>, vector<32x128xbf16>, vector<2x128xf32> -> vector<2x128xf32>
    %c0_3 = arith.constant 0 : index
    %c0_4 = arith.constant 0 : index
    %4 = vector.load %arg2[%c0_3, %c0_4] : memref<2x32xf32, #tpu.memory_space<vmem>>, vector<2x32xf32>
    %5 = arith.truncf %4 : vector<2x32xf32> to vector<2x32xbf16>
    %c32 = arith.constant 32 : index
    %c0_5 = arith.constant 0 : index
    %6 = vector.load %arg5[%c32, %c0_5] : memref<128x128xbf16, #tpu.memory_space<vmem>>, vector<32x128xbf16>
    %cst_6 = arith.constant dense<0.000000e+00> : vector<2x128xf32>
    %7 = tpu.matmul %5, %6, %cst_6 {dimension_numbers = #tpu.dot_dimension_numbers<[1], [0], [0], [1], [0, 0, 1, 1], [], []>} : vector<2x32xbf16>, vector<32x128xbf16>, vector<2x128xf32> -> vector<2x128xf32>
    %8 = arith.addf %3, %7 : vector<2x128xf32>
    %c0_7 = arith.constant 0 : index
    %c0_8 = arith.constant 0 : index
    %9 = vector.load %arg3[%c0_7, %c0_8] : memref<2x32xf32, #tpu.memory_space<vmem>>, vector<2x32xf32>
    %10 = arith.truncf %9 : vector<2x32xf32> to vector<2x32xbf16>
    %c64 = arith.constant 64 : index
    %c0_9 = arith.constant 0 : index
    %11 = vector.load %arg5[%c64, %c0_9] : memref<128x128xbf16, #tpu.memory_space<vmem>>, vector<32x128xbf16>
    %cst_10 = arith.constant dense<0.000000e+00> : vector<2x128xf32>
    %12 = tpu.matmul %10, %11, %cst_10 {dimension_numbers = #tpu.dot_dimension_numbers<[1], [0], [0], [1], [0, 0, 1, 1], [], []>} : vector<2x32xbf16>, vector<32x128xbf16>, vector<2x128xf32> -> vector<2x128xf32>
    %13 = arith.addf %8, %12 : vector<2x128xf32>
    %c0_11 = arith.constant 0 : index
    %c0_12 = arith.constant 0 : index
    %14 = vector.load %arg4[%c0_11, %c0_12] : memref<2x32xf32, #tpu.memory_space<vmem>>, vector<2x32xf32>
    %15 = arith.truncf %14 : vector<2x32xf32> to vector<2x32xbf16>
    %c96 = arith.constant 96 : index
    %c0_13 = arith.constant 0 : index
    %16 = vector.load %arg5[%c96, %c0_13] : memref<128x128xbf16, #tpu.memory_space<vmem>>, vector<32x128xbf16>
    %cst_14 = arith.constant dense<0.000000e+00> : vector<2x128xf32>
    %17 = tpu.matmul %15, %16, %cst_14 {dimension_numbers = #tpu.dot_dimension_numbers<[1], [0], [0], [1], [0, 0, 1, 1], [], []>} : vector<2x32xbf16>, vector<32x128xbf16>, vector<2x128xf32> -> vector<2x128xf32>
    %18 = arith.addf %13, %17 : vector<2x128xf32>
    %c0_15 = arith.constant 0 : index
    %c0_16 = arith.constant 0 : index
    %19 = vector.load %arg6[%c0_15, %c0_16] : memref<1x128xf32, #tpu.memory_space<vmem>>, vector<1x128xf32>
    %20 = vector.broadcast %19 : vector<1x128xf32> to vector<2x128xf32>
    %21 = arith.addf %18, %20 : vector<2x128xf32>
    %cst_17 = arith.constant 0.000000e+00 : f32
    %22 = vector.broadcast %cst_17 : f32 to vector<2x128xf32>
    %23 = arith.maximumf %21, %22 : vector<2x128xf32>
    %24 = arith.truncf %23 : vector<2x128xf32> to vector<2x128xbf16>
    %c0_18 = arith.constant 0 : index
    %c0_19 = arith.constant 0 : index
    %25 = vector.load %arg7[%c0_18, %c0_19] : memref<128x128xbf16, #tpu.memory_space<vmem>>, vector<128x128xbf16>
    %cst_20 = arith.constant dense<0.000000e+00> : vector<2x128xf32>
    %26 = tpu.matmul %24, %25, %cst_20 {dimension_numbers = #tpu.dot_dimension_numbers<[1], [0], [0], [1], [0, 0, 1, 1], [], []>} : vector<2x128xbf16>, vector<128x128xbf16>, vector<2x128xf32> -> vector<2x128xf32>
    %c0_21 = arith.constant 0 : index
    %c0_22 = arith.constant 0 : index
    %27 = vector.load %arg8[%c0_21, %c0_22] : memref<1x128xf32, #tpu.memory_space<vmem>>, vector<1x128xf32>
    %28 = vector.broadcast %27 : vector<1x128xf32> to vector<2x128xf32>
    %29 = arith.addf %26, %28 : vector<2x128xf32>
    %30 = math.absf %29 : vector<2x128xf32>
    %c0_23 = arith.constant 0 : index
    %c0_24 = arith.constant 0 : index
    %31 = vector.load %arg9[%c0_23, %c0_24] : memref<128x128xf32, #tpu.memory_space<vmem>>, vector<128x128xf32>
    %cst_25 = arith.constant dense<0.000000e+00> : vector<2x128xf32>
    %32 = tpu.matmul %30, %31, %cst_25 {dimension_numbers = #tpu.dot_dimension_numbers<[1], [0], [0], [1], [0, 0, 1, 1], [], []>} : vector<2x128xf32>, vector<128x128xf32>, vector<2x128xf32> -> vector<2x128xf32>
    %cst_26 = arith.constant 9.99999996E-13 : f32
    %33 = vector.broadcast %cst_26 : f32 to vector<2x128xf32>
    %34 = arith.maximumf %32, %33 : vector<2x128xf32>
    %35 = arith.divf %29, %34 : vector<2x128xf32>
    %c0_27 = arith.constant 0 : index
    %c0_28 = arith.constant 0 : index
    %36 = vector.load %arg10[%c0_27, %c0_28] : memref<2x128xf32, #tpu.memory_space<vmem>>, vector<2x128xf32>
    tpu.vector_store %arg10[%c0_27, %c0_28], %35 {strides = array<i32>} : memref<2x128xf32, #tpu.memory_space<vmem>>, vector<2x128xf32>,
    return
  }
  func.func @transform_0(%arg0: i32) -> (i32, i32) {
    %c0_i32 = arith.constant 0 : i32
    %c0_i32_0 = arith.constant 0 : i32
    return %arg0, %c0_i32 : i32, i32
  }
  func.func @transform_1(%arg0: i32) -> (i32, i32) {
    %c0_i32 = arith.constant 0 : i32
    %c0_i32_0 = arith.constant 0 : i32
    return %arg0, %c0_i32 : i32, i32
  }
  func.func @transform_2(%arg0: i32) -> (i32, i32) {
    %c0_i32 = arith.constant 0 : i32
    %c0_i32_0 = arith.constant 0 : i32
    return %arg0, %c0_i32 : i32, i32
  }
  func.func @transform_3(%arg0: i32) -> (i32, i32) {
    %c0_i32 = arith.constant 0 : i32
    %c0_i32_0 = arith.constant 0 : i32
    return %arg0, %c0_i32 : i32, i32
  }
  func.func @transform_4(%arg0: i32) -> (i32, i32) {
    %c0_i32 = arith.constant 0 : i32
    %c0_i32_0 = arith.constant 0 : i32
    %c0_i32_1 = arith.constant 0 : i32
    return %c0_i32, %c0_i32_0 : i32, i32
  }
  func.func @transform_5(%arg0: i32) -> (i32, i32) {
    %c0_i32 = arith.constant 0 : i32
    %c0_i32_0 = arith.constant 0 : i32
    %c0_i32_1 = arith.constant 0 : i32
    return %c0_i32, %c0_i32_0 : i32, i32
  }
  func.func @transform_6(%arg0: i32) -> (i32, i32) {
    %c0_i32 = arith.constant 0 : i32
    %c0_i32_0 = arith.constant 0 : i32
    %c0_i32_1 = arith.constant 0 : i32
    return %c0_i32, %c0_i32_0 : i32, i32
  }
  func.func @transform_7(%arg0: i32) -> (i32, i32) {
    %c0_i32 = arith.constant 0 : i32
    %c0_i32_0 = arith.constant 0 : i32
    %c0_i32_1 = arith.constant 0 : i32
    return %c0_i32, %c0_i32_0 : i32, i32
  }
  func.func @transform_8(%arg0: i32) -> (i32, i32) {
    %c0_i32 = arith.constant 0 : i32
    %c0_i32_0 = arith.constant 0 : i32
    %c0_i32_1 = arith.constant 0 : i32
    return %c0_i32, %c0_i32_0 : i32, i32
  }
  func.func @transform_9(%arg0: i32) -> (i32, i32) {
    %c0_i32 = arith.constant 0 : i32
    %c0_i32_0 = arith.constant 0 : i32
    return %arg0, %c0_i32 : i32, i32
  }
}

</mosaic_0001>

<llo_original>
// kernel: tpu_custom_call.1
$region0: #{tpu_custom_call.1}
  #allocation0 [shape = 'u32[]', space=smem, size = 0x4, offset = 0x4, fixed_abs, tag = 'smem constant byte address 0x4 - core index']
  #allocation1 [shape = 'u32[144,128]{1,0:T(1,128)}', space=vmem, size = 0x12000, scoped, tag = 'internal scratch']
  %s0 = inlined_call_operand.hbm [shape: f32[2,32], index: 0, kind: input, shape index: {}]
  %s1 = inlined_call_operand.vmem [shape: f32[2,32], index: 1, kind: input, shape index: {}]
  %s2 = inlined_call_operand.vmem [shape: f32[2,32], index: 2, kind: input, shape index: {}]
  %s3 = inlined_call_operand.vmem [shape: f32[2,32], index: 3, kind: input, shape index: {}]
  %s4 = inlined_call_operand.hbm [shape: bf16[128,128], index: 4, kind: input, shape index: {}]
  %s5 = inlined_call_operand.vmem [shape: f32[1,128], index: 5, kind: input, shape index: {}]
  %s6 = inlined_call_operand.hbm [shape: bf16[128,128], index: 6, kind: input, shape index: {}]
  %s7 = inlined_call_operand.vmem [shape: f32[1,128], index: 7, kind: input, shape index: {}]
  %s8 = inlined_call_operand.hbm [shape: f32[128,128], index: 8, kind: input, shape index: {}]
  %s9 = inlined_call_operand.hbm [shape: f32[2,128], index: 9, kind: output, shape index: {}]
  %s10 = sld [smem:[#allocation0]]
  $region62: #{tpu_custom_call.1} parent=0
    _
  %s12 = ssub.s32 1, %s10
  %s13 = scalar_select 0, %s12, %s10
  $region1: #{tpu_custom_call.1} parent=0
    #allocation2 [shape = 'u8[1024]{0}', space=vmem, size = 0x400, scoped, tag = 'input window, operand 0, single buffered']
    #allocation3 [shape = 's32[1]{0}', space=sflag, size = 0x4, scoped, tag = 'scoped memory for tpu_custom_call.1']
    #allocation4 [shape = 's32[1]{0}', space=sflag, size = 0x4, scoped, tag = 'scoped memory for tpu_custom_call.1']
    #allocation5 [shape = 'u8[32768]{0}', space=vmem, size = 0x8000, scoped, tag = 'input window, operand 4, single buffered']
    #allocation6 [shape = 's32[1]{0}', space=sflag, size = 0x4, scoped, tag = 'scoped memory for tpu_custom_call.1']
    #allocation7 [shape = 'u8[32768]{0}', space=vmem, size = 0x8000, scoped, tag = 'input window, operand 6, single buffered']
    #allocation8 [shape = 'u8[65536]{0}', space=vmem, size = 0x10000, scoped, tag = 'input window, operand 8, single buffered']
    #allocation9 [shape = 's32[1]{0}', space=sflag, size = 0x4, scoped, tag = 'scoped memory for tpu_custom_call.1']
    #allocation10 [shape = 'u8[1024]{0}', space=vmem, size = 0x400, scoped, tag = 'output window, operand 0, single buffered']
    %14 = vsyncpa [#allocation3], 0
    %15 = vsyncpa [#allocation6], 0
    %16 = vsyncpa [#allocation9], 0
    %17 = vsyncpa [#allocation4], 0
    // Predicated region
    $region2: #{tpu_custom_call.1} parent=1 // pred_check
      _
    $region3: #{tpu_custom_call.1} parent=1 // pred_check_branch
      %19 = sbr.rel (0) target = $region5
    $region4: #{tpu_custom_call.1} parent=1 // pred_region
      %s21 = ssub.s32 32, 32
      %22 = vsyncadd [#allocation3], %s21
      %s24 = sshll.u32 [#allocation2], 4
      %s25 = int_to_ptr.vmem [resolvable:$true] %s24
      %27 = dma.hbm_to_vmem [thread:$0]  %s0, 32, %s25, [#allocation3]
    $region5: #{tpu_custom_call.1} parent=1 // pred_fallthru
      _
    // Predicated region
    $region6: #{tpu_custom_call.1} parent=1 // pred_check
      _
    $region7: #{tpu_custom_call.1} parent=1 // pred_check_branch
      %29 = sbr.rel (0) target = $region9
    $region8: #{tpu_custom_call.1} parent=1 // pred_region
      _
    $region9: #{tpu_custom_call.1} parent=1 // pred_fallthru
      _
    // Predicated region
    $region10: #{tpu_custom_call.1} parent=1 // pred_check
      _
    $region11: #{tpu_custom_call.1} parent=1 // pred_check_branch
      %31 = sbr.rel (0) target = $region13
    $region12: #{tpu_custom_call.1} parent=1 // pred_region
      _
    $region13: #{tpu_custom_call.1} parent=1 // pred_fallthru
      _
    // Predicated region
    $region14: #{tpu_custom_call.1} parent=1 // pred_check
      _
    $region15: #{tpu_custom_call.1} parent=1 // pred_check_branch
      %33 = sbr.rel (0) target = $region17
    $region16: #{tpu_custom_call.1} parent=1 // pred_region
      _
    $region17: #{tpu_custom_call.1} parent=1 // pred_fallthru
      _
    // Predicated region
    $region18: #{tpu_custom_call.1} parent=1 // pred_check
      _
    $region19: #{tpu_custom_call.1} parent=1 // pred_check_branch
      %35 = sbr.rel (0) target = $region21
    $region20: #{tpu_custom_call.1} parent=1 // pred_region
      %s37 = ssub.s32 1024, 1024
      %38 = vsyncadd [#allocation6], %s37
      %s39 = sshll.u32 [#allocation5], 4
      %s40 = int_to_ptr.vmem [resolvable:$true] %s39
      %45 = dma.hbm_to_vmem [thread:$0]  %s4, 1024, %s40, [#allocation6], 64, 64, 4
    $region21: #{tpu_custom_call.1} parent=1 // pred_fallthru
      _
    // Predicated region
    $region22: #{tpu_custom_call.1} parent=1 // pred_check
      _
    $region23: #{tpu_custom_call.1} parent=1 // pred_check_branch
      %47 = sbr.rel (0) target = $region25
    $region24: #{tpu_custom_call.1} parent=1 // pred_region
      _
    $region25: #{tpu_custom_call.1} parent=1 // pred_fallthru
      _
    // Predicated region
    $region26: #{tpu_custom_call.1} parent=1 // pred_check
      _
    $region27: #{tpu_custom_call.1} parent=1 // pred_check_branch
      %49 = sbr.rel (0) target = $region29
    $region28: #{tpu_custom_call.1} parent=1 // pred_region
      %s51 = ssub.s32 1024, 1024
      %52 = vsyncadd [#allocation6], %s51
      %s53 = sshll.u32 [#allocation7], 4
      %s54 = int_to_ptr.vmem [resolvable:$true] %s53
      %59 = dma.hbm_to_vmem [thread:$0]  %s6, 1024, %s54, [#allocation6], 64, 64, 4
    $region29: #{tpu_custom_call.1} parent=1 // pred_fallthru
      _
    // Predicated region
    $region30: #{tpu_custom_call.1} parent=1 // pred_check
      _
    $region31: #{tpu_custom_call.1} parent=1 // pred_check_branch
      %61 = sbr.rel (0) target = $region33
    $region32: #{tpu_custom_call.1} parent=1 // pred_region
      _
    $region33: #{tpu_custom_call.1} parent=1 // pred_fallthru
      _
    // Predicated region
    $region34: #{tpu_custom_call.1} parent=1 // pred_check
      _
    $region35: #{tpu_custom_call.1} parent=1 // pred_check_branch
      %63 = sbr.rel (0) target = $region37
    $region36: #{tpu_custom_call.1} parent=1 // pred_region
      %s65 = ssub.s32 2048, 2048
      %66 = vsyncadd [#allocation9], %s65
      %s67 = sshll.u32 [#allocation8], 4
      %s68 = int_to_ptr.vmem [resolvable:$true] %s67
      %73 = dma.hbm_to_vmem [thread:$0]  %s8, 2048, %s68, [#allocation9], 128, 128, 8
    $region37: #{tpu_custom_call.1} parent=1 // pred_fallthru
      _
    // Predicated region
    $region38: #{tpu_custom_call.1} parent=1 // pred_check
      _
    $region39: #{tpu_custom_call.1} parent=1 // pred_check_branch
      %75 = sbr.rel (0) target = $region41
    $region40: #{tpu_custom_call.1} parent=1 // pred_region
      %76 = dma.done [#allocation3], 32
    $region41: #{tpu_custom_call.1} parent=1 // pred_fallthru
      _
    // Predicated region
    $region42: #{tpu_custom_call.1} parent=1 // pred_check
      _
    $region43: #{tpu_custom_call.1} parent=1 // pred_check_branch
      %78 = sbr.rel (0) target = $region45
    $region44: #{tpu_custom_call.1} parent=1 // pred_region
      %79 = dma.done [#allocation6], 1024
    $region45: #{tpu_custom_call.1} parent=1 // pred_fallthru
      _
    // Predicated region
    $region46: #{tpu_custom_call.1} parent=1 // pred_check
      _
    $region47: #{tpu_custom_call.1} parent=1 // pred_check_branch
      %81 = sbr.rel (0) target = $region49
    $region48: #{tpu_custom_call.1} parent=1 // pred_region
      %82 = dma.done [#allocation6], 1024
    $region49: #{tpu_custom_call.1} parent=1 // pred_fallthru
      _
    // Predicated region
    $region50: #{tpu_custom_call.1} parent=1 // pred_check
      _
    $region51: #{tpu_custom_call.1} parent=1 // pred_check_branch
      %84 = sbr.rel (0) target = $region53
    $region52: #{tpu_custom_call.1} parent=1 // pred_region
      %85 = dma.done [#allocation9], 2048
    $region53: #{tpu_custom_call.1} parent=1 // pred_fallthru
      _
    %v87 = vld [vmem:[#allocation2] sm:$0x3]
    %v88 = vpack.c.bf16 %v87, %v87
    %v89 = vld [vmem:[#allocation5] sm:$0xf]
    %v90 = vld [vmem:[#allocation5 + $0x4] sm:$0xf]
    %v91 = vld [vmem:[#allocation5 + $0x8] sm:$0xf]
    %v92 = vld [vmem:[#allocation5 + $0xc] sm:$0xf]
    %v93 = vld [vmem:[%s1] sm:$0x3]
    %v94 = vpack.c.bf16 %v93, %v93
    %v95 = vld [vmem:[#allocation5 + $0x10] sm:$0xf]
    %v96 = vld [vmem:[#allocation5 + $0x14] sm:$0xf]
    %v97 = vld [vmem:[#allocation5 + $0x18] sm:$0xf]
    %v98 = vld [vmem:[#allocation5 + $0x1c] sm:$0xf]
    %v103 = vunpack.c.l.b16 %v95
    %v104 = vunpack.c.l.b16 %v96
    %v105 = vunpack.c.l.b16 %v97
    %v106 = vunpack.c.l.b16 %v98
    %v107 = vpack.c.b16 %v104, %v103
    %v108 = vpack.c.b16 %v106, %v105
    %vm111 = vcmask 261120
    %v113 = vsel %vm111, %v94, 0
    %115 = vmatprep.subr.bf16.mxu0 0
    %116 = vmatpush1.bf16.msra.mxu0 %v107
    %117 = vmatprep.subr.bf16.mxu0 0
    %118 = vmatpush1.bf16.msra.mxu0 %v108
    %119 = vmatprep.subr.bf16.mxu0 0
    %120 = vmatpush1.bf16.msra.mxu0 0
    %121 = vmatprep.subr.bf16.mxu0 0
    %122 = vmatpush1.bf16.msra.mxu0 0
    %123 = vmatprep.subr.bf16.mxu0 0
    %124 = vmatpush1.bf16.msra.mxu0 0
    %125 = vmatprep.subr.bf16.mxu0 0
    %126 = vmatpush1.bf16.msra.mxu0 0
    %127 = vmatprep.subr.bf16.mxu0 0
    %128 = vmatpush1.bf16.msra.mxu0 0
    %129 = vmatprep.subr.bf16.mxu0 0
    %130 = vmatpush1.bf16.msra.mxu0 0
    %131 = vmatprep.subr.bf16.mxu0 0
    %132 = vmatpush1.bf16.msra.mxu0 0
    %133 = vmatprep.subr.bf16.mxu0 0
    %134 = vmatpush1.bf16.msra.mxu0 0
    %135 = vmatprep.subr.bf16.mxu0 0
    %136 = vmatpush1.bf16.msra.mxu0 0
    %137 = vmatprep.subr.bf16.mxu0 0
    %138 = vmatpush1.bf16.msra.mxu0 0
    %139 = vmatprep.subr.bf16.mxu0 0
    %140 = vmatpush1.bf16.msra.mxu0 0
    %141 = vmatprep.subr.bf16.mxu0 0
    %142 = vmatpush1.bf16.msra.mxu0 0
    %143 = vmatprep.subr.bf16.mxu0 0
    %144 = vmatpush1.bf16.msra.mxu0 0
    %145 = vmatprep.subr.bf16.mxu0 0
    %146 = vmatpush1.bf16.msra.mxu0 0
    %147 = vmatprep.mubr.bf16.mxu0 0
    %148 = vmatmul.mubr.bf16.gmra.mrb[0].mxu0 %v113
    %v149 = vpop.f32.mrb[0].mxu0
    %v150 = vadd.f32 0.0, %v149
    %v151 = vpop.f32.mrb[0].mxu0
    %v152 = vpop.f32.mrb[0].mxu0
    %v153 = vpop.f32.mrb[0].mxu0
    %154 = vdwg.mxu0
    %v159 = vunpack.c.l.b16 %v89
    %v160 = vunpack.c.l.b16 %v90
    %v161 = vunpack.c.l.b16 %v91
    %v162 = vunpack.c.l.b16 %v92
    %v163 = vpack.c.b16 %v160, %v159
    %v164 = vpack.c.b16 %v162, %v161
    %v168 = vsel %vm111, %v88, 0
    %170 = vmatprep.subr.bf16.mxu0 0
    %171 = vmatpush1.bf16.msra.mxu0 %v163
    %172 = vmatprep.subr.bf16.mxu0 0
    %173 = vmatpush1.bf16.msra.mxu0 %v164
    %174 = vmatprep.subr.bf16.mxu0 0
    %175 = vmatpush1.bf16.msra.mxu0 0
    %176 = vmatprep.subr.bf16.mxu0 0
    %177 = vmatpush1.bf16.msra.mxu0 0
    %178 = vmatprep.subr.bf16.mxu0 0
    %179 = vmatpush1.bf16.msra.mxu0 0
    %180 = vmatprep.subr.bf16.mxu0 0
    %181 = vmatpush1.bf16.msra.mxu0 0
    %182 = vmatprep.subr.bf16.mxu0 0
    %183 = vmatpush1.bf16.msra.mxu0 0
    %184 = vmatprep.subr.bf16.mxu0 0
    %185 = vmatpush1.bf16.msra.mxu0 0
    %186 = vmatprep.subr.bf16.mxu0 0
    %187 = vmatpush1.bf16.msra.mxu0 0
    %188 = vmatprep.subr.bf16.mxu0 0
    %189 = vmatpush1.bf16.msra.mxu0 0
    %190 = vmatprep.subr.bf16.mxu0 0
    %191 = vmatpush1.bf16.msra.mxu0 0
    %192 = vmatprep.subr.bf16.mxu0 0
    %193 = vmatpush1.bf16.msra.mxu0 0
    %194 = vmatprep.subr.bf16.mxu0 0
    %195 = vmatpush1.bf16.msra.mxu0 0
    %196 = vmatprep.subr.bf16.mxu0 0
    %197 = vmatpush1.bf16.msra.mxu0 0
    %198 = vmatprep.subr.bf16.mxu0 0
    %199 = vmatpush1.bf16.msra.mxu0 0
    %200 = vmatprep.subr.bf16.mxu0 0
    %201 = vmatpush1.bf16.msra.mxu0 0
    %202 = vmatprep.mubr.bf16.mxu0 0
    %203 = vmatmul.mubr.bf16.gmra.mrb[0].mxu0 %v168
    %v204 = vpop.f32.mrb[0].mxu0
    %v205 = vadd.f32 %v150, %v204
    %v206 = vpop.f32.mrb[0].mxu0
    %v207 = vpop.f32.mrb[0].mxu0
    %v208 = vpop.f32.mrb[0].mxu0
    %209 = vdwg.mxu0
    %v210 = vld [vmem:[%s2] sm:$0x3]
    %v211 = vpack.c.bf16 %v210, %v210
    %v212 = vld [vmem:[#allocation5 + $0x20] sm:$0xf]
    %v213 = vld [vmem:[#allocation5 + $0x24] sm:$0xf]
    %v214 = vld [vmem:[#allocation5 + $0x28] sm:$0xf]
    %v215 = vld [vmem:[#allocation5 + $0x2c] sm:$0xf]
    %v220 = vunpack.c.l.b16 %v212
    %v221 = vunpack.c.l.b16 %v213
    %v222 = vunpack.c.l.b16 %v214
    %v223 = vunpack.c.l.b16 %v215
    %v224 = vpack.c.b16 %v221, %v220
    %v225 = vpack.c.b16 %v223, %v222
    %v229 = vsel %vm111, %v211, 0
    %231 = vmatprep.subr.bf16.mxu0 0
    %232 = vmatpush1.bf16.msra.mxu0 %v224
    %233 = vmatprep.subr.bf16.mxu0 0
    %234 = vmatpush1.bf16.msra.mxu0 %v225
    %235 = vmatprep.subr.bf16.mxu0 0
    %236 = vmatpush1.bf16.msra.mxu0 0
    %237 = vmatprep.subr.bf16.mxu0 0
    %238 = vmatpush1.bf16.msra.mxu0 0
    %239 = vmatprep.subr.bf16.mxu0 0
    %240 = vmatpush1.bf16.msra.mxu0 0
    %241 = vmatprep.subr.bf16.mxu0 0
    %242 = vmatpush1.bf16.msra.mxu0 0
    %243 = vmatprep.subr.bf16.mxu0 0
    %244 = vmatpush1.bf16.msra.mxu0 0
    %245 = vmatprep.subr.bf16.mxu0 0
    %246 = vmatpush1.bf16.msra.mxu0 0
    %247 = vmatprep.subr.bf16.mxu0 0
    %248 = vmatpush1.bf16.msra.mxu0 0
    %249 = vmatprep.subr.bf16.mxu0 0
    %250 = vmatpush1.bf16.msra.mxu0 0
    %251 = vmatprep.subr.bf16.mxu0 0
    %252 = vmatpush1.bf16.msra.mxu0 0
    %253 = vmatprep.subr.bf16.mxu0 0
    %254 = vmatpush1.bf16.msra.mxu0 0
    %255 = vmatprep.subr.bf16.mxu0 0
    %256 = vmatpush1.bf16.msra.mxu0 0
    %257 = vmatprep.subr.bf16.mxu0 0
    %258 = vmatpush1.bf16.msra.mxu0 0
    %259 = vmatprep.subr.bf16.mxu0 0
    %260 = vmatpush1.bf16.msra.mxu0 0
    %261 = vmatprep.subr.bf16.mxu0 0
    %262 = vmatpush1.bf16.msra.mxu0 0
    %263 = vmatprep.mubr.bf16.mxu0 0
    %264 = vmatmul.mubr.bf16.gmra.mrb[0].mxu0 %v229
    %v265 = vpop.f32.mrb[0].mxu0
    %v266 = vadd.f32 0.0, %v265
    %v267 = vpop.f32.mrb[0].mxu0
    %v268 = vpop.f32.mrb[0].mxu0
    %v269 = vpop.f32.mrb[0].mxu0
    %270 = vdwg.mxu0
    %v271 = vadd.f32 %v205, %v266
    %v272 = vld [vmem:[%s3] sm:$0x3]
    %v273 = vpack.c.bf16 %v272, %v272
    %v274 = vld [vmem:[#allocation5 + $0x30] sm:$0xf]
    %v275 = vld [vmem:[#allocation5 + $0x34] sm:$0xf]
    %v276 = vld [vmem:[#allocation5 + $0x38] sm:$0xf]
    %v277 = vld [vmem:[#allocation5 + $0x3c] sm:$0xf]
    %v282 = vunpack.c.l.b16 %v274
    %v283 = vunpack.c.l.b16 %v275
    %v284 = vunpack.c.l.b16 %v276
    %v285 = vunpack.c.l.b16 %v277
    %v286 = vpack.c.b16 %v283, %v282
    %v287 = vpack.c.b16 %v285, %v284
    %v291 = vsel %vm111, %v273, 0
    %293 = vmatprep.subr.bf16.mxu0 0
    %294 = vmatpush1.bf16.msra.mxu0 %v286
    %295 = vmatprep.subr.bf16.mxu0 0
    %296 = vmatpush1.bf16.msra.mxu0 %v287
    %297 = vmatprep.subr.bf16.mxu0 0
    %298 = vmatpush1.bf16.msra.mxu0 0
    %299 = vmatprep.subr.bf16.mxu0 0
    %300 = vmatpush1.bf16.msra.mxu0 0
    %301 = vmatprep.subr.bf16.mxu0 0
    %302 = vmatpush1.bf16.msra.mxu0 0
    %303 = vmatprep.subr.bf16.mxu0 0
    %304 = vmatpush1.bf16.msra.mxu0 0
    %305 = vmatprep.subr.bf16.mxu0 0
    %306 = vmatpush1.bf16.msra.mxu0 0
    %307 = vmatprep.subr.bf16.mxu0 0
    %308 = vmatpush1.bf16.msra.mxu0 0
    %309 = vmatprep.subr.bf16.mxu0 0
    %310 = vmatpush1.bf16.msra.mxu0 0
    %311 = vmatprep.subr.bf16.mxu0 0
    %312 = vmatpush1.bf16.msra.mxu0 0
    %313 = vmatprep.subr.bf16.mxu0 0
    %314 = vmatpush1.bf16.msra.mxu0 0
    %315 = vmatprep.subr.bf16.mxu0 0
    %316 = vmatpush1.bf16.msra.mxu0 0
    %317 = vmatprep.subr.bf16.mxu0 0
    %318 = vmatpush1.bf16.msra.mxu0 0
    %319 = vmatprep.subr.bf16.mxu0 0
    %320 = vmatpush1.bf16.msra.mxu0 0
    %321 = vmatprep.subr.bf16.mxu0 0
    %322 = vmatpush1.bf16.msra.mxu0 0
    %323 = vmatprep.subr.bf16.mxu0 0
    %324 = vmatpush1.bf16.msra.mxu0 0
    %325 = vmatprep.mubr.bf16.mxu0 0
    %326 = vmatmul.mubr.bf16.gmra.mrb[0].mxu0 %v291
    %v327 = vpop.f32.mrb[0].mxu0
    %v328 = vadd.f32 0.0, %v327
    %v329 = vpop.f32.mrb[0].mxu0
    %v330 = vpop.f32.mrb[0].mxu0
    %v331 = vpop.f32.mrb[0].mxu0
    %332 = vdwg.mxu0
    %v333 = vadd.f32 %v271, %v328
    %v334 = vld [vmem:[%s5] sm:$0x1]
    %v336 = vlaneseq
    %v337 = vshrl.u32 %v336, 7
    %v338 = vsub.s32 0, %v337
    %v339 = vrot.slane %v334, %v338
    %v341 = vadd.f32 %v333, %v339
    %v342 = vmax.f32 %v341, 0.0
    %v343 = vpack.c.bf16 %v342, %v342
    %v344 = vld [vmem:[#allocation7] sm:$0xf]
    %v345 = vld [vmem:[#allocation7 + $0x4] sm:$0xf]
    %v346 = vld [vmem:[#allocation7 + $0x8] sm:$0xf]
    %v347 = vld [vmem:[#allocation7 + $0xc] sm:$0xf]
    %v348 = vld [vmem:[#allocation7 + $0x10] sm:$0xf]
    %v349 = vld [vmem:[#allocation7 + $0x14] sm:$0xf]
    %v350 = vld [vmem:[#allocation7 + $0x18] sm:$0xf]
    %v351 = vld [vmem:[#allocation7 + $0x1c] sm:$0xf]
    %v352 = vld [vmem:[#allocation7 + $0x20] sm:$0xf]
    %v353 = vld [vmem:[#allocation7 + $0x24] sm:$0xf]
    %v354 = vld [vmem:[#allocation7 + $0x28] sm:$0xf]
    %v355 = vld [vmem:[#allocation7 + $0x2c] sm:$0xf]
    %v356 = vld [vmem:[#allocation7 + $0x30] sm:$0xf]
    %v357 = vld [vmem:[#allocation7 + $0x34] sm:$0xf]
    %v358 = vld [vmem:[#allocation7 + $0x38] sm:$0xf]
    %v359 = vld [vmem:[#allocation7 + $0x3c] sm:$0xf]
    %v360 = vld [vmem:[%s7] sm:$0x1]
    %v362 = vlaneseq
    %v363 = vshrl.u32 %v362, 7
    %v364 = vsub.s32 0, %v363
    %v365 = vrot.slane %v360, %v364
    %v383 = vunpack.c.l.b16 %v344
    %v384 = vunpack.c.l.b16 %v345
    %v385 = vunpack.c.l.b16 %v346
    %v386 = vunpack.c.l.b16 %v347
    %v387 = vunpack.c.l.b16 %v348
    %v388 = vunpack.c.l.b16 %v349
    %v389 = vunpack.c.l.b16 %v350
    %v390 = vunpack.c.l.b16 %v351
    %v391 = vunpack.c.l.b16 %v352
    %v392 = vunpack.c.l.b16 %v353
    %v393 = vunpack.c.l.b16 %v354
    %v394 = vunpack.c.l.b16 %v355
    %v395 = vunpack.c.l.b16 %v356
    %v396 = vunpack.c.l.b16 %v357
    %v397 = vunpack.c.l.b16 %v358
    %v398 = vunpack.c.l.b16 %v359
    %v399 = vpack.c.b16 %v384, %v383
    %v400 = vpack.c.b16 %v386, %v385
    %v401 = vpack.c.b16 %v388, %v387
    %v402 = vpack.c.b16 %v390, %v389
    %v403 = vpack.c.b16 %v392, %v391
    %v404 = vpack.c.b16 %v394, %v393
    %v405 = vpack.c.b16 %v396, %v395
    %v406 = vpack.c.b16 %v398, %v397
    %415 = vmatprep.subr.bf16.mxu0 0
    %416 = vmatpush1.bf16.msra.mxu0 %v399
    %417 = vmatprep.subr.bf16.mxu0 0
    %418 = vmatpush1.bf16.msra.mxu0 %v400
    %419 = vmatprep.subr.bf16.mxu0 0
    %420 = vmatpush1.bf16.msra.mxu0 %v401
    %421 = vmatprep.subr.bf16.mxu0 0
    %422 = vmatpush1.bf16.msra.mxu0 %v402
    %423 = vmatprep.subr.bf16.mxu0 0
    %424 = vmatpush1.bf16.msra.mxu0 %v403
    %425 = vmatprep.subr.bf16.mxu0 0
    %426 = vmatpush1.bf16.msra.mxu0 %v404
    %427 = vmatprep.subr.bf16.mxu0 0
    %428 = vmatpush1.bf16.msra.mxu0 %v405
    %429 = vmatprep.subr.bf16.mxu0 0
    %430 = vmatpush1.bf16.msra.mxu0 %v406
    %431 = vmatprep.subr.bf16.mxu0 0
    %432 = vmatpush1.bf16.msra.mxu0 0
    %433 = vmatprep.subr.bf16.mxu0 0
    %434 = vmatpush1.bf16.msra.mxu0 0
    %435 = vmatprep.subr.bf16.mxu0 0
    %436 = vmatpush1.bf16.msra.mxu0 0
    %437 = vmatprep.subr.bf16.mxu0 0
    %438 = vmatpush1.bf16.msra.mxu0 0
    %439 = vmatprep.subr.bf16.mxu0 0
    %440 = vmatpush1.bf16.msra.mxu0 0
    %441 = vmatprep.subr.bf16.mxu0 0
    %442 = vmatpush1.bf16.msra.mxu0 0
    %443 = vmatprep.subr.bf16.mxu0 0
    %444 = vmatpush1.bf16.msra.mxu0 0
    %445 = vmatprep.subr.bf16.mxu0 0
    %446 = vmatpush1.bf16.msra.mxu0 0
    %447 = vmatprep.mubr.bf16.mxu0 0
    %448 = vmatmul.mubr.bf16.gmra.mrb[0].mxu0 %v343
    %v449 = vpop.f32.mrb[0].mxu0
    %v450 = vadd.f32 %v365, %v449
    %v451 = vpop.f32.mrb[0].mxu0
    %v452 = vpop.f32.mrb[0].mxu0
    %v453 = vpop.f32.mrb[0].mxu0
    %454 = vdwg.mxu0
    %v455 = vand.u32 2147483647, %v450
    %v456 = vld [vmem:[#allocation8] sm:$0xff]
    %v457 = vld [vmem:[#allocation8 + $0x8] sm:$0xff]
    %v458 = vld [vmem:[#allocation8 + $0x10] sm:$0xff]
    %v459 = vld [vmem:[#allocation8 + $0x18] sm:$0xff]
    %v460 = vld [vmem:[#allocation8 + $0x20] sm:$0xff]
    %v461 = vld [vmem:[#allocation8 + $0x28] sm:$0xff]
    %v462 = vld [vmem:[#allocation8 + $0x30] sm:$0xff]
    %v463 = vld [vmem:[#allocation8 + $0x38] sm:$0xff]
    %v464 = vld [vmem:[#allocation8 + $0x40] sm:$0xff]
    %v465 = vld [vmem:[#allocation8 + $0x48] sm:$0xff]
    %v466 = vld [vmem:[#allocation8 + $0x50] sm:$0xff]
    %v467 = vld [vmem:[#allocation8 + $0x58] sm:$0xff]
    %v468 = vld [vmem:[#allocation8 + $0x60] sm:$0xff]
    %v469 = vld [vmem:[#allocation8 + $0x68] sm:$0xff]
    %v470 = vld [vmem:[#allocation8 + $0x70] sm:$0xff]
    %v471 = vld [vmem:[#allocation8 + $0x78] sm:$0xff]
    %472 = vmatprep.subr.mxu0 0.0
    %473 = vmatpush1.msra.mxu0 %v456
    %474 = vmatprep.subr.mxu0 0.0
    %475 = vmatpush1.msra.mxu0 %v457
    %476 = vmatprep.subr.mxu0 0.0
    %477 = vmatpush1.msra.mxu0 %v458
    %478 = vmatprep.subr.mxu0 0.0
    %479 = vmatpush1.msra.mxu0 %v459
    %480 = vmatprep.subr.mxu0 0.0
    %481 = vmatpush1.msra.mxu0 %v460
    %482 = vmatprep.subr.mxu0 0.0
    %483 = vmatpush1.msra.mxu0 %v461
    %484 = vmatprep.subr.mxu0 0.0
    %485 = vmatpush1.msra.mxu0 %v462
    %486 = vmatprep.subr.mxu0 0.0
    %487 = vmatpush1.msra.mxu0 %v463
    %488 = vmatprep.subr.mxu0 0.0
    %489 = vmatpush1.msra.mxu0 %v464
    %490 = vmatprep.subr.mxu0 0.0
    %491 = vmatpush1.msra.mxu0 %v465
    %492 = vmatprep.subr.mxu0 0.0
    %493 = vmatpush1.msra.mxu0 %v466
    %494 = vmatprep.subr.mxu0 0.0
    %495 = vmatpush1.msra.mxu0 %v467
    %496 = vmatprep.subr.mxu0 0.0
    %497 = vmatpush1.msra.mxu0 %v468
    %498 = vmatprep.subr.mxu0 0.0
    %499 = vmatpush1.msra.mxu0 %v469
    %500 = vmatprep.subr.mxu0 0.0
    %501 = vmatpush1.msra.mxu0 %v470
    %502 = vmatprep.subr.mxu0 0.0
    %503 = vmatpush1.msra.mxu0 %v471
    %504 = vmatprep.subr.mxu0 0.0
    %505 = vmatpush1.msra.mxu0 0.0
    %506 = vmatprep.subr.mxu0 0.0
    %507 = vmatpush1.msra.mxu0 0.0
    %508 = vmatprep.subr.mxu0 0.0
    %509 = vmatpush1.msra.mxu0 0.0
    %510 = vmatprep.subr.mxu0 0.0
    %511 = vmatpush1.msra.mxu0 0.0
    %512 = vmatprep.subr.mxu0 0.0
    %513 = vmatpush1.msra.mxu0 0.0
    %514 = vmatprep.subr.mxu0 0.0
    %515 = vmatpush1.msra.mxu0 0.0
    %516 = vmatprep.subr.mxu0 0.0
    %517 = vmatpush1.msra.mxu0 0.0
    %518 = vmatprep.subr.mxu0 0.0
    %519 = vmatpush1.msra.mxu0 0.0
    %520 = vmatprep.subr.mxu0 0.0
    %521 = vmatpush1.msra.mxu0 0.0
    %522 = vmatprep.subr.mxu0 0.0
    %523 = vmatpush1.msra.mxu0 0.0
    %524 = vmatprep.subr.mxu0 0.0
    %525 = vmatpush1.msra.mxu0 0.0
    %526 = vmatprep.subr.mxu0 0.0
    %527 = vmatpush1.msra.mxu0 0.0
    %528 = vmatprep.subr.mxu0 0.0
    %529 = vmatpush1.msra.mxu0 0.0
    %530 = vmatprep.subr.mxu0 0.0
    %531 = vmatpush1.msra.mxu0 0.0
    %532 = vmatprep.subr.mxu0 0.0
    %533 = vmatpush1.msra.mxu0 0.0
    %534 = vmatprep.subr.mxu0 0.0
    %535 = vmatpush1.msra.mxu0 0.0
    %536 = vmatprep.mubr.f32.mxu0 0.0
    %537 = vmatmul.mubr.f32.gmra.mrb[0].mxu0 %v455
    %v538 = vpop.f32.mrb[0].mxu0
    %v539 = vadd.f32 0.0, %v538
    %v540 = vpop.f32.mrb[0].mxu0
    %541 = vdwg.mxu0
    %v542 = vmax.f32 %v539, 1e-12
    %v543 = vrcp.pop %v542
    %v544 = vmul.f32 %v450, %v543
    %545 = vst [vmem:[#allocation10] sm:$0x3] %v544
    // Predicated region
    $region54: #{tpu_custom_call.1} parent=1 // pred_check
      _
    $region55: #{tpu_custom_call.1} parent=1 // pred_check_branch
      %547 = sbr.rel (0) target = $region57
    $region56: #{tpu_custom_call.1} parent=1 // pred_region
      %s549 = ssub.s32 32, 32
      %550 = vsyncadd [#allocation4], %s549
      %s552 = sshll.u32 [#allocation10], 4
      %s553 = int_to_ptr.vmem [resolvable:$true] %s552
      %555 = dma.vmem_to_hbm [thread:$0]  %s553, 32, %s9, [#allocation4]
    $region57: #{tpu_custom_call.1} parent=1 // pred_fallthru
      _
    // Predicated region
    $region58: #{tpu_custom_call.1} parent=1 // pred_check
      _
    $region59: #{tpu_custom_call.1} parent=1 // pred_check_branch
      %557 = sbr.rel (0) target = $region61
    $region60: #{tpu_custom_call.1} parent=1 // pred_region
      %558 = dma.done [#allocation4], 32
    $region61: #{tpu_custom_call.1} parent=1 // pred_fallthru
      _
    %559 = vsyncpa [#allocation3], 1
    %560 = vsyncpa [#allocation6], 1
    %561 = vsyncpa [#allocation9], 1
    %562 = vsyncpa [#allocation4], 1

</llo_original>
